<compile_context>
chip_gen: v5e
topology: v5e:2x2
jax: 0.10.0
libtpu: 0.0.40
codegen_flags: <defaults>
</compile_context>

<pallas_src>
import functools
import math

import jax
import jax.numpy as jnp
from jax.experimental import pallas as pl
from jax.experimental.pallas import tpu as pltpu


_ATAN_T3P8 = 2.414213562373095   # tan(3*pi/8)
_ATAN_TP8 = 0.4142135623730951   # tan(pi/8)


def _atan(x):
    """Elementwise arctan built only from mul/add/div/compare/select.

    Cephes atanf-style range reduction + degree-9 odd polynomial;
    |abs error| ~ 1e-7, far below the loss tolerance. Avoids relying on a
    lax.atan_p lowering in Mosaic.
    """
    ax = jnp.abs(x)
    big = ax > _ATAN_T3P8
    mid = jnp.logical_and(ax > _ATAN_TP8, jnp.logical_not(big))
    # Range-reduce to |xr| <= tan(pi/8); guard the 1/ax division off-branch.
    xr_big = -1.0 / jnp.where(big, ax, 1.0)
    xr_mid = (ax - 1.0) / (ax + 1.0)
    xr = jnp.where(big, xr_big, jnp.where(mid, xr_mid, ax))
    base = jnp.where(
        big, jnp.float32(math.pi / 2),
        jnp.where(mid, jnp.float32(math.pi / 4), jnp.float32(0.0)))
    z = xr * xr
    poly = ((8.05374449538e-2 * z - 1.38776856032e-1) * z
            + 1.99777106478e-1) * z - 3.33329491539e-1
    y = base + (poly * z * xr + xr)
    return jnp.where(x < 0, -y, y)


def _iou_kernel(pred_ref, target_ref, loss_ref, *, loss_type):
    # pred_ref / target_ref: (4, T)  rows = cx, cy, w, h ; T boxes on lanes.
    # loss_ref: (1, T) float32.
    p = pred_ref[...].astype(jnp.float32)
    t = target_ref[...].astype(jnp.float32)

    px, py, pw, ph = p[0:1, :], p[1:2, :], p[2:3, :], p[3:4, :]
    tx, ty, tw, th = t[0:1, :], t[1:2, :], t[2:3, :], t[3:4, :]

    p_tl_x, p_tl_y = px - 0.5 * pw, py - 0.5 * ph
    p_br_x, p_br_y = px + 0.5 * pw, py + 0.5 * ph
    t_tl_x, t_tl_y = tx - 0.5 * tw, ty - 0.5 * th
    t_br_x, t_br_y = tx + 0.5 * tw, ty + 0.5 * th

    # Intersection.
    tl_x = jnp.maximum(p_tl_x, t_tl_x)
    tl_y = jnp.maximum(p_tl_y, t_tl_y)
    br_x = jnp.minimum(p_br_x, t_br_x)
    br_y = jnp.minimum(p_br_y, t_br_y)

    area_p = pw * ph
    area_g = tw * th
    valid = jnp.logical_and(tl_x < br_x, tl_y < br_y)        # "en" in torch
    area_i = jnp.where(valid, (br_x - tl_x) * (br_y - tl_y), 0.0)
    area_u = area_p + area_g - area_i
    iou = area_i / (area_u + 1e-16)

    if loss_type == "iou":
        loss = 1.0 - iou * iou
    else:
        # Smallest enclosing box.
        c_tl_x = jnp.minimum(p_tl_x, t_tl_x)
        c_tl_y = jnp.minimum(p_tl_y, t_tl_y)
        c_br_x = jnp.maximum(p_br_x, t_br_x)
        c_br_y = jnp.maximum(p_br_y, t_br_y)
        if loss_type == "giou":
            area_c = (c_br_x - c_tl_x) * (c_br_y - c_tl_y)
            giou = iou - (area_c - area_u) / jnp.maximum(area_c, 1e-16)
            loss = 1.0 - jnp.clip(giou, -1.0, 1.0)
        else:
            cw = c_br_x - c_tl_x
            ch = c_br_y - c_tl_y
            outer_dig = cw * cw + ch * ch
            dx = px - tx
            dy = py - ty
            inter_dig = dx * dx + dy * dy
            if loss_type == "diou":
                diou = iou - inter_dig / jnp.maximum(outer_dig, 1e-16)
                loss = 1.0 - jnp.clip(diou, -1.0, 1.0)
            elif loss_type == "ciou":
                d_atan = _atan(pw / ph) - _atan(tw / th)
                v = (4.0 / (math.pi ** 2)) * d_atan * d_atan
                s = 1.0 - iou
                alpha = v / (s + v)
                ciou = (iou - inter_dig / jnp.maximum(outer_dig, 1e-16)
                        - alpha * v)
                loss = 1.0 - jnp.clip(ciou, -1.0, 1.0)
            else:
                raise ValueError(f"unknown loss_type: {loss_type}")

    loss_ref[...] = loss


def iou_loss(pred, target, reduction="none", loss_type="ciou", tile_n=None):
    """Pallas equivalent of IOUloss.forward.

    pred, target: (..., 4) boxes as (cx, cy, w, h); flattened to (N, 4).
    """
    assert pred.shape[0] == target.shape[0]
    pred = pred.reshape(-1, 4)
    target = target.reshape(-1, 4)
    n = pred.shape[0]

    lane = 128
    if tile_n is None:
        n_pad_min = ((n + lane - 1) // lane) * lane
        # Biggest tile that keeps DMA time above per-grid-step overhead while
        # staying tiny in VMEM (double-buffered: ~2 * 2 * 4*TILE_N*4B).
        tile_n = min(n_pad_min, 8192)
    assert tile_n % lane == 0
    n_pad = ((n + tile_n - 1) // tile_n) * tile_n

    if n_pad > n:
        pad = n_pad - n
        # Pad with well-formed, non-identical boxes so no branch produces
        # NaN/Inf in the (discarded) padded lanes.
        pad_pred = jnp.broadcast_to(
            jnp.asarray([0.0, 0.0, 2.0, 2.0], dtype=pred.dtype), (pad, 4))
        pad_tgt = jnp.broadcast_to(
            jnp.asarray([1.0, 1.0, 2.0, 2.0], dtype=target.dtype), (pad, 4))
        pred = jnp.concatenate([pred, pad_pred], axis=0)
        target = jnp.concatenate([target, pad_tgt], axis=0)

    # Lane-dense layout: box index on the lane axis, 4 coords on sublanes.
    pred_t = pred.T        # (4, n_pad)
    target_t = target.T    # (4, n_pad)

    out = pl.pallas_call(
        functools.partial(_iou_kernel, loss_type=loss_type),
        out_shape=jax.ShapeDtypeStruct((1, n_pad), jnp.float32),
        grid_spec=pltpu.PrefetchScalarGridSpec(
            num_scalar_prefetch=0,
            grid=(n_pad // tile_n,),
            in_specs=[
                pl.BlockSpec((4, tile_n), lambda i: (0, i)),
                pl.BlockSpec((4, tile_n), lambda i: (0, i)),
            ],
            out_specs=pl.BlockSpec((1, tile_n), lambda i: (0, i)),
        ),
        compiler_params=pltpu.CompilerParams(
            dimension_semantics=("parallel",),   # per-box losses independent
        ),
    )(pred_t, target_t)

    loss = out[0, :n]
    # TODO(synk): 'mean'/'sum' could be fused into the kernel with an SMEM/VMEM
    # scalar accumulator (grid axis 'arbitrary'); kept in XLA since the (N,)
    # writeback is a tiny fraction of the input traffic.
    if reduction == "mean":
        loss = jnp.mean(loss)
    elif reduction == "sum":
        loss = jnp.sum(loss)
    return loss


def _iou_loss_ref(pred, target, reduction="none", loss_type="ciou"):
    """Pure-JAX reference mirroring the PyTorch IOUloss exactly."""
    pred = pred.reshape(-1, 4).astype(jnp.float32)
    target = target.reshape(-1, 4).astype(jnp.float32)
    tl = jnp.maximum(pred[:, :2] - pred[:, 2:] / 2, target[:, :2] - target[:, 2:] / 2)
    br = jnp.minimum(pred[:, :2] + pred[:, 2:] / 2, target[:, :2] + target[:, 2:] / 2)
    area_p = jnp.prod(pred[:, 2:], axis=1)
    area_g = jnp.prod(target[:, 2:], axis=1)
    en = jnp.prod((tl < br).astype(jnp.float32), axis=1)
    area_i = jnp.prod(br - tl, axis=1) * en
    area_u = area_p + area_g - area_i
    iou = area_i / (area_u + 1e-16)
    if loss_type == "iou":
        loss = 1 - iou ** 2
    else:
        c_tl = jnp.minimum(pred[:, :2] - pred[:, 2:] / 2, target[:, :2] - target[:, 2:] / 2)
        c_br = jnp.maximum(pred[:, :2] + pred[:, 2:] / 2, target[:, :2] + target[:, 2:] / 2)
        if loss_type == "giou":
            area_c = jnp.prod(c_br - c_tl, axis=1)
            giou = iou - (area_c - area_u) / jnp.maximum(area_c, 1e-16)
            loss = 1 - jnp.clip(giou, -1.0, 1.0)
        else:
            outer_dig = jnp.sum((c_br - c_tl) ** 2, axis=1)
            inter_dig = jnp.sum((pred[:, :2] - target[:, :2]) ** 2, axis=1)
            if loss_type == "diou":
                diou = iou - inter_dig / jnp.maximum(outer_dig, 1e-16)
                loss = 1 - jnp.clip(diou, -1.0, 1.0)
            else:  # ciou
                v = 4 / math.pi ** 2 * (jnp.arctan(pred[:, 2] / pred[:, 3])
                                        - jnp.arctan(target[:, 2] / target[:, 3])) ** 2
                s = 1 - iou
                alpha = v / (s + v)
                ciou = iou - inter_dig / jnp.maximum(outer_dig, 1e-16) - alpha * v
                loss = 1 - jnp.clip(ciou, -1.0, 1.0)
    if reduction == "mean":
        loss = loss.mean()
    elif reduction == "sum":
        loss = loss.sum()
    return loss


if __name__ == "__main__":
    key = jax.random.PRNGKey(0)
    kp1, kp2, kt1, kt2 = jax.random.split(key, 4)

    # Small, module-consistent shapes: 8 boxes of (cx, cy, w, h), w/h > 0.
    N = 8
    pred = jnp.concatenate(
        [jax.random.uniform(kp1, (N, 2), jnp.float32, 0.0, 10.0),
         jax.random.uniform(kp2, (N, 2), jnp.float32, 0.5, 4.0)], axis=1)
    target = jnp.concatenate(
        [jax.random.uniform(kt1, (N, 2), jnp.float32, 0.0, 10.0),
         jax.random.uniform(kt2, (N, 2), jnp.float32, 0.5, 4.0)], axis=1)

    # All loss types, reduction='none' (module default is ciou/none).
    for lt in ("ciou", "diou", "giou", "iou"):
        out = jax.block_until_ready(
            iou_loss(pred, target, reduction="none", loss_type=lt))
        ref = _iou_loss_ref(pred, target, reduction="none", loss_type=lt)
        assert out.shape == (N,)
        assert jnp.allclose(out, ref, atol=1e-4, rtol=1e-4), lt

    # mean / sum reductions with the default ciou.
    out_m = jax.block_until_ready(iou_loss(pred, target, reduction="mean"))
    out_s = jax.block_until_ready(iou_loss(pred, target, reduction="sum"))
    assert jnp.allclose(out_m, _iou_loss_ref(pred, target, "mean", "ciou"),
                        atol=1e-4, rtol=1e-4)
    assert jnp.allclose(out_s, _iou_loss_ref(pred, target, "sum", "ciou"),
                        atol=1e-4, rtol=1e-4)

    # Exercise multi-tile grid + padding (N not a multiple of 128, small tile).
    N2 = 300
    k1, k2, k3, k4 = jax.random.split(jax.random.PRNGKey(1), 4)
    pred2 = jnp.concatenate(
        [jax.random.uniform(k1, (N2, 2), jnp.float32, 0.0, 10.0),
         jax.random.uniform(k2, (N2, 2), jnp.float32, 0.5, 4.0)], axis=1)
    target2 = jnp.concatenate(
        [jax.random.uniform(k3, (N2, 2), jnp.float32, 0.0, 10.0),
         jax.random.uniform(k4, (N2, 2), jnp.float32, 0.5, 4.0)], axis=1)
    out2 = jax.block_until_ready(
        iou_loss(pred2, target2, reduction="none", loss_type="ciou", tile_n=128))
    ref2 = _iou_loss_ref(pred2, target2, "none", "ciou")
    assert out2.shape == (N2,)
    assert jnp.allclose(out2, ref2, atol=1e-4, rtol=1e-4)

    print("KERNEL_OK")
</pallas_src>

<mosaic_0001>
module attributes {stable_mosaic.version = 11 : i64} {
  func.func @_iou_kernel(%arg0: i32, %arg1: memref<4x128xf32, #tpu.memory_space<vmem>>, %arg2: memref<4x128xf32, #tpu.memory_space<vmem>>, %arg3: memref<1x128xf32, #tpu.memory_space<vmem>>) attributes {dimension_semantics = [#tpu.dimension_semantics<parallel>], iteration_bounds = array<i64: 1>, scalar_prefetch = 0 : i64, scratch_operands = 0 : i64, tpu.core_type = #tpu.core_type<tc>, window_params = [{transform_indices = @transform_0, window_bounds = array<i64: 4, 128>}, {transform_indices = @transform_1, window_bounds = array<i64: 4, 128>}, {transform_indices = @transform_2, window_bounds = array<i64: 1, 128>}]} {
    %c0 = arith.constant 0 : index
    %c0_0 = arith.constant 0 : index
    %0 = vector.load %arg1[%c0, %c0_0] : memref<4x128xf32, #tpu.memory_space<vmem>>, vector<4x128xf32>
    %c0_1 = arith.constant 0 : index
    %c0_2 = arith.constant 0 : index
    %1 = vector.load %arg2[%c0_1, %c0_2] : memref<4x128xf32, #tpu.memory_space<vmem>>, vector<4x128xf32>
    %2 = vector.extract_strided_slice %0 {offsets = [0, 0], sizes = [1, 128], strides = [1, 1]} : vector<4x128xf32> to vector<1x128xf32>
    %3 = vector.extract_strided_slice %0 {offsets = [1, 0], sizes = [1, 128], strides = [1, 1]} : vector<4x128xf32> to vector<1x128xf32>
    %4 = vector.extract_strided_slice %0 {offsets = [2, 0], sizes = [1, 128], strides = [1, 1]} : vector<4x128xf32> to vector<1x128xf32>
    %5 = vector.extract_strided_slice %0 {offsets = [3, 0], sizes = [1, 128], strides = [1, 1]} : vector<4x128xf32> to vector<1x128xf32>
    %6 = vector.extract_strided_slice %1 {offsets = [0, 0], sizes = [1, 128], strides = [1, 1]} : vector<4x128xf32> to vector<1x128xf32>
    %7 = vector.extract_strided_slice %1 {offsets = [1, 0], sizes = [1, 128], strides = [1, 1]} : vector<4x128xf32> to vector<1x128xf32>
    %8 = vector.extract_strided_slice %1 {offsets = [2, 0], sizes = [1, 128], strides = [1, 1]} : vector<4x128xf32> to vector<1x128xf32>
    %9 = vector.extract_strided_slice %1 {offsets = [3, 0], sizes = [1, 128], strides = [1, 1]} : vector<4x128xf32> to vector<1x128xf32>
    %cst = arith.constant 5.000000e-01 : f32
    %10 = vector.broadcast %cst : f32 to vector<1x128xf32>
    %11 = arith.mulf %10, %4 : vector<1x128xf32>
    %12 = arith.subf %2, %11 : vector<1x128xf32>
    %cst_3 = arith.constant 5.000000e-01 : f32
    %13 = vector.broadcast %cst_3 : f32 to vector<1x128xf32>
    %14 = arith.mulf %13, %5 : vector<1x128xf32>
    %15 = arith.subf %3, %14 : vector<1x128xf32>
    %cst_4 = arith.constant 5.000000e-01 : f32
    %16 = vector.broadcast %cst_4 : f32 to vector<1x128xf32>
    %17 = arith.mulf %16, %4 : vector<1x128xf32>
    %18 = arith.addf %2, %17 : vector<1x128xf32>
    %cst_5 = arith.constant 5.000000e-01 : f32
    %19 = vector.broadcast %cst_5 : f32 to vector<1x128xf32>
    %20 = arith.mulf %19, %5 : vector<1x128xf32>
    %21 = arith.addf %3, %20 : vector<1x128xf32>
    %cst_6 = arith.constant 5.000000e-01 : f32
    %22 = vector.broadcast %cst_6 : f32 to vector<1x128xf32>
    %23 = arith.mulf %22, %8 : vector<1x128xf32>
    %24 = arith.subf %6, %23 : vector<1x128xf32>
    %cst_7 = arith.constant 5.000000e-01 : f32
    %25 = vector.broadcast %cst_7 : f32 to vector<1x128xf32>
    %26 = arith.mulf %25, %9 : vector<1x128xf32>
    %27 = arith.subf %7, %26 : vector<1x128xf32>
    %cst_8 = arith.constant 5.000000e-01 : f32
    %28 = vector.broadcast %cst_8 : f32 to vector<1x128xf32>
    %29 = arith.mulf %28, %8 : vector<1x128xf32>
    %30 = arith.addf %6, %29 : vector<1x128xf32>
    %cst_9 = arith.constant 5.000000e-01 : f32
    %31 = vector.broadcast %cst_9 : f32 to vector<1x128xf32>
    %32 = arith.mulf %31, %9 : vector<1x128xf32>
    %33 = arith.addf %7, %32 : vector<1x128xf32>
    %34 = arith.maximumf %12, %24 : vector<1x128xf32>
    %35 = arith.maximumf %15, %27 : vector<1x128xf32>
    %36 = arith.minimumf %18, %30 : vector<1x128xf32>
    %37 = arith.minimumf %21, %33 : vector<1x128xf32>
    %38 = arith.mulf %4, %5 : vector<1x128xf32>
    %39 = arith.mulf %8, %9 : vector<1x128xf32>
    %40 = arith.cmpf olt, %34, %36 : vector<1x128xf32>
    %41 = arith.cmpf olt, %35, %37 : vector<1x128xf32>
    %42 = arith.andi %40, %41 : vector<1x128xi1>
    %43 = arith.subf %36, %34 : vector<1x128xf32>
    %44 = arith.subf %37, %35 : vector<1x128xf32>
    %45 = arith.mulf %43, %44 : vector<1x128xf32>
    %cst_10 = arith.constant 0.000000e+00 : f32
    %46 = vector.broadcast %cst_10 : f32 to vector<1x128xf32>
    %47 = arith.select %42, %45, %46 : vector<1x128xi1>, vector<1x128xf32>
    %48 = arith.addf %38, %39 : vector<1x128xf32>
    %49 = arith.subf %48, %47 : vector<1x128xf32>
    %cst_11 = arith.constant 1.000000e-16 : f32
    %50 = vector.broadcast %cst_11 : f32 to vector<1x128xf32>
    %51 = arith.addf %49, %50 : vector<1x128xf32>
    %52 = arith.divf %47, %51 : vector<1x128xf32>
    %53 = arith.minimumf %12, %24 : vector<1x128xf32>
    %54 = arith.minimumf %15, %27 : vector<1x128xf32>
    %55 = arith.maximumf %18, %30 : vector<1x128xf32>
    %56 = arith.maximumf %21, %33 : vector<1x128xf32>
    %57 = arith.subf %55, %53 : vector<1x128xf32>
    %58 = arith.subf %56, %54 : vector<1x128xf32>
    %59 = arith.mulf %57, %57 : vector<1x128xf32>
    %60 = arith.mulf %58, %58 : vector<1x128xf32>
    %61 = arith.addf %59, %60 : vector<1x128xf32>
    %62 = arith.subf %2, %6 : vector<1x128xf32>
    %63 = arith.subf %3, %7 : vector<1x128xf32>
    %64 = arith.mulf %62, %62 : vector<1x128xf32>
    %65 = arith.mulf %63, %63 : vector<1x128xf32>
    %66 = arith.addf %64, %65 : vector<1x128xf32>
    %67 = arith.divf %4, %5 : vector<1x128xf32>
    %68 = math.absf %67 : vector<1x128xf32>
    %cst_12 = arith.constant 2.41421366 : f32
    %69 = vector.broadcast %cst_12 : f32 to vector<1x128xf32>
    %70 = arith.cmpf ogt, %68, %69 : vector<1x128xf32>
    %cst_13 = arith.constant 0.414213568 : f32
    %71 = vector.broadcast %cst_13 : f32 to vector<1x128xf32>
    %72 = arith.cmpf ogt, %68, %71 : vector<1x128xf32>
    %cst_14 = arith.constant dense<true> : vector<1x128xi1>
    %73 = arith.xori %70, %cst_14 : vector<1x128xi1>
    %74 = arith.andi %72, %73 : vector<1x128xi1>
    %cst_15 = arith.constant 1.000000e+00 : f32
    %75 = vector.broadcast %cst_15 : f32 to vector<1x128xf32>
    %76 = arith.select %70, %68, %75 : vector<1x128xi1>, vector<1x128xf32>
    %cst_16 = arith.constant -1.000000e+00 : f32
    %77 = vector.broadcast %cst_16 : f32 to vector<1x128xf32>
    %78 = arith.divf %77, %76 : vector<1x128xf32>
    %cst_17 = arith.constant 1.000000e+00 : f32
    %79 = vector.broadcast %cst_17 : f32 to vector<1x128xf32>
    %80 = arith.subf %68, %79 : vector<1x128xf32>
    %cst_18 = arith.constant 1.000000e+00 : f32
    %81 = vector.broadcast %cst_18 : f32 to vector<1x128xf32>
    %82 = arith.addf %68, %81 : vector<1x128xf32>
    %83 = arith.divf %80, %82 : vector<1x128xf32>
    %84 = arith.select %74, %83, %68 : vector<1x128xi1>, vector<1x128xf32>
    %85 = arith.select %70, %78, %84 : vector<1x128xi1>, vector<1x128xf32>
    %cst_19 = arith.constant 0.785398185 : f32
    %cst_20 = arith.constant 0.000000e+00 : f32
    %86 = vector.broadcast %cst_19 : f32 to vector<1x128xf32>
    %87 = vector.broadcast %cst_20 : f32 to vector<1x128xf32>
    %88 = arith.select %74, %86, %87 : vector<1x128xi1>, vector<1x128xf32>
    %cst_21 = arith.constant 1.57079637 : f32
    %89 = vector.broadcast %cst_21 : f32 to vector<1x128xf32>
    %90 = arith.select %70, %89, %88 : vector<1x128xi1>, vector<1x128xf32>
    %91 = arith.mulf %85, %85 : vector<1x128xf32>
    %cst_22 = arith.constant 0.0805374458 : f32
    %92 = vector.broadcast %cst_22 : f32 to vector<1x128xf32>
    %93 = arith.mulf %92, %91 : vector<1x128xf32>
    %cst_23 = arith.constant 0.138776854 : f32
    %94 = vector.broadcast %cst_23 : f32 to vector<1x128xf32>
    %95 = arith.subf %93, %94 : vector<1x128xf32>
    %96 = arith.mulf %95, %91 : vector<1x128xf32>
    %cst_24 = arith.constant 0.199777111 : f32
    %97 = vector.broadcast %cst_24 : f32 to vector<1x128xf32>
    %98 = arith.addf %96, %97 : vector<1x128xf32>
    %99 = arith.mulf %98, %91 : vector<1x128xf32>
    %cst_25 = arith.constant 0.333329499 : f32
    %100 = vector.broadcast %cst_25 : f32 to vector<1x128xf32>
    %101 = arith.subf %99, %100 : vector<1x128xf32>
    %102 = arith.mulf %101, %91 : vector<1x128xf32>
    %103 = arith.mulf %102, %85 : vector<1x128xf32>
    %104 = arith.addf %103, %85 : vector<1x128xf32>
    %105 = arith.addf %90, %104 : vector<1x128xf32>
    %cst_26 = arith.constant 0.000000e+00 : f32
    %106 = vector.broadcast %cst_26 : f32 to vector<1x128xf32>
    %107 = arith.cmpf olt, %67, %106 : vector<1x128xf32>
    %cst_27 = arith.constant 0.000000e+00 : f32
    %108 = vector.broadcast %cst_27 : f32 to vector<1x128xf32>
    %109 = arith.subf %108, %105 : vector<1x128xf32>
    %110 = arith.select %107, %109, %105 : vector<1x128xi1>, vector<1x128xf32>
    %111 = arith.divf %8, %9 : vector<1x128xf32>
    %112 = math.absf %111 : vector<1x128xf32>
    %cst_28 = arith.constant 2.41421366 : f32
    %113 = vector.broadcast %cst_28 : f32 to vector<1x128xf32>
    %114 = arith.cmpf ogt, %112, %113 : vector<1x128xf32>
    %cst_29 = arith.constant 0.414213568 : f32
    %115 = vector.broadcast %cst_29 : f32 to vector<1x128xf32>
    %116 = arith.cmpf ogt, %112, %115 : vector<1x128xf32>
    %cst_30 = arith.constant dense<true> : vector<1x128xi1>
    %117 = arith.xori %114, %cst_30 : vector<1x128xi1>
    %118 = arith.andi %116, %117 : vector<1x128xi1>
    %cst_31 = arith.constant 1.000000e+00 : f32
    %119 = vector.broadcast %cst_31 : f32 to vector<1x128xf32>
    %120 = arith.select %114, %112, %119 : vector<1x128xi1>, vector<1x128xf32>
    %cst_32 = arith.constant -1.000000e+00 : f32
    %121 = vector.broadcast %cst_32 : f32 to vector<1x128xf32>
    %122 = arith.divf %121, %120 : vector<1x128xf32>
    %cst_33 = arith.constant 1.000000e+00 : f32
    %123 = vector.broadcast %cst_33 : f32 to vector<1x128xf32>
    %124 = arith.subf %112, %123 : vector<1x128xf32>
    %cst_34 = arith.constant 1.000000e+00 : f32
    %125 = vector.broadcast %cst_34 : f32 to vector<1x128xf32>
    %126 = arith.addf %112, %125 : vector<1x128xf32>
    %127 = arith.divf %124, %126 : vector<1x128xf32>
    %128 = arith.select %118, %127, %112 : vector<1x128xi1>, vector<1x128xf32>
    %129 = arith.select %114, %122, %128 : vector<1x128xi1>, vector<1x128xf32>
    %cst_35 = arith.constant 0.785398185 : f32
    %cst_36 = arith.constant 0.000000e+00 : f32
    %130 = vector.broadcast %cst_35 : f32 to vector<1x128xf32>
    %131 = vector.broadcast %cst_36 : f32 to vector<1x128xf32>
    %132 = arith.select %118, %130, %131 : vector<1x128xi1>, vector<1x128xf32>
    %cst_37 = arith.constant 1.57079637 : f32
    %133 = vector.broadcast %cst_37 : f32 to vector<1x128xf32>
    %134 = arith.select %114, %133, %132 : vector<1x128xi1>, vector<1x128xf32>
    %135 = arith.mulf %129, %129 : vector<1x128xf32>
    %cst_38 = arith.constant 0.0805374458 : f32
    %136 = vector.broadcast %cst_38 : f32 to vector<1x128xf32>
    %137 = arith.mulf %136, %135 : vector<1x128xf32>
    %cst_39 = arith.constant 0.138776854 : f32
    %138 = vector.broadcast %cst_39 : f32 to vector<1x128xf32>
    %139 = arith.subf %137, %138 : vector<1x128xf32>
    %140 = arith.mulf %139, %135 : vector<1x128xf32>
    %cst_40 = arith.constant 0.199777111 : f32
    %141 = vector.broadcast %cst_40 : f32 to vector<1x128xf32>
    %142 = arith.addf %140, %141 : vector<1x128xf32>
    %143 = arith.mulf %142, %135 : vector<1x128xf32>
    %cst_41 = arith.constant 0.333329499 : f32
    %144 = vector.broadcast %cst_41 : f32 to vector<1x128xf32>
    %145 = arith.subf %143, %144 : vector<1x128xf32>
    %146 = arith.mulf %145, %135 : vector<1x128xf32>
    %147 = arith.mulf %146, %129 : vector<1x128xf32>
    %148 = arith.addf %147, %129 : vector<1x128xf32>
    %149 = arith.addf %134, %148 : vector<1x128xf32>
    %cst_42 = arith.constant 0.000000e+00 : f32
    %150 = vector.broadcast %cst_42 : f32 to vector<1x128xf32>
    %151 = arith.cmpf olt, %111, %150 : vector<1x128xf32>
    %cst_43 = arith.constant 0.000000e+00 : f32
    %152 = vector.broadcast %cst_43 : f32 to vector<1x128xf32>
    %153 = arith.subf %152, %149 : vector<1x128xf32>
    %154 = arith.select %151, %153, %149 : vector<1x128xi1>, vector<1x128xf32>
    %155 = arith.subf %110, %154 : vector<1x128xf32>
    %cst_44 = arith.constant 0.405284733 : f32
    %156 = vector.broadcast %cst_44 : f32 to vector<1x128xf32>
    %157 = arith.mulf %156, %155 : vector<1x128xf32>
    %158 = arith.mulf %157, %155 : vector<1x128xf32>
    %cst_45 = arith.constant 1.000000e+00 : f32
    %159 = vector.broadcast %cst_45 : f32 to vector<1x128xf32>
    %160 = arith.subf %159, %52 : vector<1x128xf32>
    %161 = arith.addf %160, %158 : vector<1x128xf32>
    %162 = arith.divf %158, %161 : vector<1x128xf32>
    %cst_46 = arith.constant 1.000000e-16 : f32
    %163 = vector.broadcast %cst_46 : f32 to vector<1x128xf32>
    %164 = arith.maximumf %61, %163 : vector<1x128xf32>
    %165 = arith.divf %66, %164 : vector<1x128xf32>
    %166 = arith.subf %52, %165 : vector<1x128xf32>
    %167 = arith.mulf %162, %158 : vector<1x128xf32>
    %168 = arith.subf %166, %167 : vector<1x128xf32>
    %cst_47 = arith.constant -1.000000e+00 : f32
    %cst_48 = arith.constant 1.000000e+00 : f32
    %169 = vector.broadcast %cst_47 : f32 to vector<1x128xf32>
    %170 = arith.maximumf %169, %168 : vector<1x128xf32>
    %171 = vector.broadcast %cst_48 : f32 to vector<1x128xf32>
    %172 = arith.minimumf %171, %170 : vector<1x128xf32>
    %cst_49 = arith.constant 1.000000e+00 : f32
    %173 = vector.broadcast %cst_49 : f32 to vector<1x128xf32>
    %174 = arith.subf %173, %172 : vector<1x128xf32>
    %c0_50 = arith.constant 0 : index
    %c0_51 = arith.constant 0 : index
    %175 = vector.load %arg3[%c0_50, %c0_51] : memref<1x128xf32, #tpu.memory_space<vmem>>, vector<1x128xf32>
    tpu.vector_store %arg3[%c0_50, %c0_51], %174 {strides = array<i32>} : memref<1x128xf32, #tpu.memory_space<vmem>>, vector<1x128xf32>,
    return
  }
  func.func @transform_0(%arg0: i32) -> (i32, i32) {
    %c0_i32 = arith.constant 0 : i32
    %c0_i32_0 = arith.constant 0 : i32
    return %c0_i32, %arg0 : i32, i32
  }
  func.func @transform_1(%arg0: i32) -> (i32, i32) {
    %c0_i32 = arith.constant 0 : i32
    %c0_i32_0 = arith.constant 0 : i32
    return %c0_i32, %arg0 : i32, i32
  }
  func.func @transform_2(%arg0: i32) -> (i32, i32) {
    %c0_i32 = arith.constant 0 : i32
    %c0_i32_0 = arith.constant 0 : i32
    return %c0_i32, %arg0 : i32, i32
  }
}

</mosaic_0001>

<llo_original>
// kernel: tpu_custom_call.1
$region0: #{tpu_custom_call.1}
  #allocation0 [shape = 'u32[]', space=smem, size = 0x4, offset = 0x4, fixed_abs, tag = 'smem constant byte address 0x4 - core index']
  #allocation1 [shape = 'u32[72,128]{1,0:T(1,128)}', space=vmem, size = 0x9000, scoped, tag = 'internal scratch']
  %s0 = inlined_call_operand.hbm [shape: f32[4,128], index: 0, kind: input, shape index: {}]
  %s1 = inlined_call_operand.hbm [shape: f32[4,128], index: 1, kind: input, shape index: {}]
  %s2 = inlined_call_operand.hbm [shape: f32[1,128], index: 2, kind: output, shape index: {}]
  %s3 = sld [smem:[#allocation0]]
  $region26: #{tpu_custom_call.1} parent=0
    _
  %s5 = ssub.s32 1, %s3
  %s6 = scalar_select 0, %s5, %s3
  $region1: #{tpu_custom_call.1} parent=0
    #allocation2 [shape = 'u8[2048]{0}', space=vmem, size = 0x800, scoped, tag = 'input window, operand 0, single buffered']
    #allocation3 [shape = 's32[1]{0}', space=sflag, size = 0x4, scoped, tag = 'scoped memory for tpu_custom_call.1']
    #allocation4 [shape = 's32[1]{0}', space=sflag, size = 0x4, scoped, tag = 'scoped memory for tpu_custom_call.1']
    #allocation5 [shape = 'u8[2048]{0}', space=vmem, size = 0x800, scoped, tag = 'input window, operand 1, single buffered']
    #allocation6 [shape = 's32[1]{0}', space=sflag, size = 0x4, scoped, tag = 'scoped memory for tpu_custom_call.1']
    #allocation7 [shape = 'u8[512]{0}', space=vmem, size = 0x400, scoped, tag = 'output window, operand 0, single buffered']
    %7 = vsyncpa [#allocation3], 0
    %8 = vsyncpa [#allocation6], 0
    %9 = vsyncpa [#allocation4], 0
    // Predicated region
    $region2: #{tpu_custom_call.1} parent=1 // pred_check
      _
    $region3: #{tpu_custom_call.1} parent=1 // pred_check_branch
      %11 = sbr.rel (0) target = $region5
    $region4: #{tpu_custom_call.1} parent=1 // pred_region
      %13 = vsyncadd [#allocation3], 0
      %s15 = sshll.u32 %s0, 4
      %s16 = int_to_ptr.hbm [resolvable:$true] %s15
      %s17 = sshll.u32 [#allocation2], 4
      %s18 = int_to_ptr.vmem [resolvable:$true] %s17
      %20 = dma.hbm_to_vmem [thread:$0]  %s16, 64, %s18, [#allocation3]
    $region5: #{tpu_custom_call.1} parent=1 // pred_fallthru
      _
    // Predicated region
    $region6: #{tpu_custom_call.1} parent=1 // pred_check
      _
    $region7: #{tpu_custom_call.1} parent=1 // pred_check_branch
      %22 = sbr.rel (0) target = $region9
    $region8: #{tpu_custom_call.1} parent=1 // pred_region
      %24 = vsyncadd [#allocation6], 0
      %s26 = sshll.u32 %s1, 4
      %s27 = int_to_ptr.hbm [resolvable:$true] %s26
      %s28 = sshll.u32 [#allocation5], 4
      %s29 = int_to_ptr.vmem [resolvable:$true] %s28
      %31 = dma.hbm_to_vmem [thread:$0]  %s27, 64, %s29, [#allocation6]
    $region9: #{tpu_custom_call.1} parent=1 // pred_fallthru
      _
    // Predicated region
    $region10: #{tpu_custom_call.1} parent=1 // pred_check
      _
    $region11: #{tpu_custom_call.1} parent=1 // pred_check_branch
      %33 = sbr.rel (0) target = $region13
    $region12: #{tpu_custom_call.1} parent=1 // pred_region
      %35 = dma.done [#allocation3], 64
    $region13: #{tpu_custom_call.1} parent=1 // pred_fallthru
      _
    // Predicated region
    $region14: #{tpu_custom_call.1} parent=1 // pred_check
      _
    $region15: #{tpu_custom_call.1} parent=1 // pred_check_branch
      %37 = sbr.rel (0) target = $region17
    $region16: #{tpu_custom_call.1} parent=1 // pred_region
      %39 = dma.done [#allocation6], 64
    $region17: #{tpu_custom_call.1} parent=1 // pred_fallthru
      _
    %v40 = vld [vmem:[#allocation2] sm:$0xf]
    %v41 = vld [vmem:[#allocation5] sm:$0xf]
    %v42 = vmul.f32 %v40, 0.5
    %v44 = vrot.slane %v42, 2
    %v46 = vsub.f32 %v40, %v44
    %v47 = vadd.f32 %v40, %v44
    %v48 = vmul.f32 %v41, 0.5
    %v50 = vrot.slane %v48, 2
    %v52 = vsub.f32 %v41, %v50
    %v53 = vadd.f32 %v41, %v50
    %v54 = vmax.f32 %v46, %v52
    %v55 = vmin.f32 %v47, %v53
    %v57 = vrot.slane %v40, 1
    %v59 = vmul.f32 %v40, %v57
    %v61 = vrot.slane %v41, 1
    %v63 = vmul.f32 %v41, %v61
    %vm64 = vcmp.lt.f32.partialorder %v54, %v55
    %v65 = vsel %vm64, 1, 0
    %v66 = vrot.slane %v65, 1
    %vm67 = vcmp.ne.s32.totalorder %v66, 0
    %vm68 = vmand %vm64, %vm67
    %v69 = vsub.f32 %v55, %v54
    %v71 = vrot.slane %v69, 1
    %v73 = vmul.f32 %v69, %v71
    %v74 = vsel %vm68, %v73, 0.0
    %v75 = vadd.f32 %v59, %v63
    %v77 = vrot.slane %v74, 6
    %v79 = vsub.f32 %v75, %v77
    %v80 = vadd.f32 %v79, 1e-16
    %v82 = vrot.slane %v80, 2
    %v84 = vrcp.pop %v82
    %v85 = vmul.f32 %v82, %v84
    %v86 = vsub.f32 1.0, %v85
    %v87 = vmul.f32 %v84, %v86
    %v88 = vadd.f32 %v84, %v87
    %vm89 = vweird.f32 %v82
    %vm90 = vweird.f32 %v84
    %vm91 = vmor %vm89, %vm90
    %v92 = vsel %vm91, %v84, %v88
    %v93 = vand.u32 2147483647, %v82
    %vm94 = vcmp.eq.f32.partialorder %v93, 8.507059e+37
    %v95 = vand.u32 %v82, 2147483648
    %v96 = vor.u32 1.1754944e-38, %v95
    %v97 = vsel %vm94, %v96, %v92
    %v98 = vmul.f32 %v74, %v97
    %v99 = vmin.f32 %v46, %v52
    %v100 = vmax.f32 %v47, %v53
    %v101 = vsub.f32 %v100, %v99
    %v102 = vmul.f32 %v101, %v101
    %v104 = vrot.slane %v102, 1
    %v106 = vadd.f32 %v102, %v104
    %v107 = vsub.f32 %v40, %v41
    %v108 = vmul.f32 %v107, %v107
    %v110 = vrot.slane %v108, 1
    %v112 = vadd.f32 %v108, %v110
    %v113 = vrcp.pop %v57
    %v114 = vmul.f32 %v57, %v113
    %v115 = vsub.f32 1.0, %v114
    %v116 = vmul.f32 %v113, %v115
    %v117 = vadd.f32 %v113, %v116
    %vm118 = vweird.f32 %v57
    %vm119 = vweird.f32 %v113
    %vm120 = vmor %vm118, %vm119
    %v121 = vsel %vm120, %v113, %v117
    %v122 = vand.u32 2147483647, %v57
    %vm123 = vcmp.eq.f32.partialorder %v122, 8.507059e+37
    %v124 = vand.u32 %v57, 2147483648
    %v125 = vor.u32 1.1754944e-38, %v124
    %v126 = vsel %vm123, %v125, %v121
    %v127 = vmul.f32 %v40, %v126
    %v128 = vand.u32 2147483647, %v127
    %vm129 = vcmp.gt.f32.partialorder %v128, 2.4142137
    %vm130 = vcmp.gt.f32.partialorder %v128, 0.41421357
    %vm131 = vmxor %vm129, 1
    %vm132 = vmand %vm130, %vm131
    %v133 = vsel %vm129, %v128, 1.0
    %v134 = vrcp.pop %v133
    %v135 = vmul.f32 %v133, %v134
    %v136 = vsub.f32 1.0, %v135
    %v137 = vmul.f32 %v134, %v136
    %v138 = vadd.f32 %v134, %v137
    %vm139 = vweird.f32 %v133
    %vm140 = vweird.f32 %v134
    %vm141 = vmor %vm139, %vm140
    %v142 = vsel %vm141, %v134, %v138
    %v143 = vand.u32 2147483647, %v133
    %vm144 = vcmp.eq.f32.partialorder %v143, 8.507059e+37
    %v145 = vand.u32 %v133, 2147483648
    %v146 = vor.u32 1.1754944e-38, %v145
    %v147 = vsel %vm144, %v146, %v142
    %v148 = vmul.f32 -1.0, %v147
    %v149 = vsub.f32 %v128, 1.0
    %v150 = vadd.f32 %v128, 1.0
    %v151 = vrcp.pop %v150
    %v152 = vmul.f32 %v150, %v151
    %v153 = vsub.f32 1.0, %v152
    %v154 = vmul.f32 %v151, %v153
    %v155 = vadd.f32 %v151, %v154
    %vm156 = vweird.f32 %v150
    %vm157 = vweird.f32 %v151
    %vm158 = vmor %vm156, %vm157
    %v159 = vsel %vm158, %v151, %v155
    %v160 = vand.u32 2147483647, %v150
    %vm161 = vcmp.eq.f32.partialorder %v160, 8.507059e+37
    %v162 = vand.u32 %v150, 2147483648
    %v163 = vor.u32 1.1754944e-38, %v162
    %v164 = vsel %vm161, %v163, %v159
    %v165 = vmul.f32 %v149, %v164
    %v166 = vsel %vm132, %v165, %v128
    %v167 = vsel %vm129, %v148, %v166
    %v168 = vsel %vm132, 0.7853982, 0.0
    %v169 = vsel %vm129, 1.5707964, %v168
    %v170 = vmul.f32 %v167, %v167
    %v171 = vmul.f32 %v170, 0.080537446
    %v172 = vsub.f32 %v171, 0.13877685
    %v173 = vmul.f32 %v172, %v170
    %v174 = vadd.f32 %v173, 0.19977711
    %v175 = vmul.f32 %v174, %v170
    %v176 = vsub.f32 %v175, 0.3333295
    %v177 = vmul.f32 %v176, %v170
    %v178 = vmul.f32 %v177, %v167
    %v179 = vadd.f32 %v178, %v167
    %v180 = vadd.f32 %v169, %v179
    %vm181 = vcmp.lt.f32.partialorder %v127, 0.0
    %v182 = vsub.f32 0.0, %v180
    %v183 = vsel %vm181, %v182, %v180
    %v184 = vrcp.pop %v61
    %v185 = vmul.f32 %v61, %v184
    %v186 = vsub.f32 1.0, %v185
    %v187 = vmul.f32 %v184, %v186
    %v188 = vadd.f32 %v184, %v187
    %vm189 = vweird.f32 %v61
    %vm190 = vweird.f32 %v184
    %vm191 = vmor %vm189, %vm190
    %v192 = vsel %vm191, %v184, %v188
    %v193 = vand.u32 2147483647, %v61
    %vm194 = vcmp.eq.f32.partialorder %v193, 8.507059e+37
    %v195 = vand.u32 %v61, 2147483648
    %v196 = vor.u32 1.1754944e-38, %v195
    %v197 = vsel %vm194, %v196, %v192
    %v198 = vmul.f32 %v41, %v197
    %v199 = vand.u32 2147483647, %v198
    %vm200 = vcmp.gt.f32.partialorder %v199, 2.4142137
    %vm201 = vcmp.gt.f32.partialorder %v199, 0.41421357
    %vm202 = vmxor %vm200, 1
    %vm203 = vmand %vm201, %vm202
    %v204 = vsel %vm200, %v199, 1.0
    %v205 = vrcp.pop %v204
    %v206 = vmul.f32 %v204, %v205
    %v207 = vsub.f32 1.0, %v206
    %v208 = vmul.f32 %v205, %v207
    %v209 = vadd.f32 %v205, %v208
    %vm210 = vweird.f32 %v204
    %vm211 = vweird.f32 %v205
    %vm212 = vmor %vm210, %vm211
    %v213 = vsel %vm212, %v205, %v209
    %v214 = vand.u32 2147483647, %v204
    %vm215 = vcmp.eq.f32.partialorder %v214, 8.507059e+37
    %v216 = vand.u32 %v204, 2147483648
    %v217 = vor.u32 1.1754944e-38, %v216
    %v218 = vsel %vm215, %v217, %v213
    %v219 = vmul.f32 -1.0, %v218
    %v220 = vsub.f32 %v199, 1.0
    %v221 = vadd.f32 %v199, 1.0
    %v222 = vrcp.pop %v221
    %v223 = vmul.f32 %v221, %v222
    %v224 = vsub.f32 1.0, %v223
    %v225 = vmul.f32 %v222, %v224
    %v226 = vadd.f32 %v222, %v225
    %vm227 = vweird.f32 %v221
    %vm228 = vweird.f32 %v222
    %vm229 = vmor %vm227, %vm228
    %v230 = vsel %vm229, %v222, %v226
    %v231 = vand.u32 2147483647, %v221
    %vm232 = vcmp.eq.f32.partialorder %v231, 8.507059e+37
    %v233 = vand.u32 %v221, 2147483648
    %v234 = vor.u32 1.1754944e-38, %v233
    %v235 = vsel %vm232, %v234, %v230
    %v236 = vmul.f32 %v220, %v235
    %v237 = vsel %vm203, %v236, %v199
    %v238 = vsel %vm200, %v219, %v237
    %v239 = vsel %vm203, 0.7853982, 0.0
    %v240 = vsel %vm200, 1.5707964, %v239
    %v241 = vmul.f32 %v238, %v238
    %v242 = vmul.f32 %v241, 0.080537446
    %v243 = vsub.f32 %v242, 0.13877685
    %v244 = vmul.f32 %v243, %v241
    %v245 = vadd.f32 %v244, 0.19977711
    %v246 = vmul.f32 %v245, %v241
    %v247 = vsub.f32 %v246, 0.3333295
    %v248 = vmul.f32 %v247, %v241
    %v249 = vmul.f32 %v248, %v238
    %v250 = vadd.f32 %v249, %v238
    %v251 = vadd.f32 %v240, %v250
    %vm252 = vcmp.lt.f32.partialorder %v198, 0.0
    %v253 = vsub.f32 0.0, %v251
    %v254 = vsel %vm252, %v253, %v251
    %v255 = vsub.f32 %v183, %v254
    %v256 = vmul.f32 %v255, 0.40528473
    %v257 = vmul.f32 %v256, %v255
    %v258 = vsub.f32 1.0, %v98
    %v260 = vrot.slane %v257, 2
    %v262 = vadd.f32 %v258, %v260
    %v264 = vrot.slane %v262, 6
    %v266 = vrcp.pop %v264
    %v267 = vmul.f32 %v264, %v266
    %v268 = vsub.f32 1.0, %v267
    %v269 = vmul.f32 %v266, %v268
    %v270 = vadd.f32 %v266, %v269
    %vm271 = vweird.f32 %v264
    %vm272 = vweird.f32 %v266
    %vm273 = vmor %vm271, %vm272
    %v274 = vsel %vm273, %v266, %v270
    %v275 = vand.u32 2147483647, %v264
    %vm276 = vcmp.eq.f32.partialorder %v275, 8.507059e+37
    %v277 = vand.u32 %v264, 2147483648
    %v278 = vor.u32 1.1754944e-38, %v277
    %v279 = vsel %vm276, %v278, %v274
    %v280 = vmul.f32 %v257, %v279
    %v281 = vmax.f32 %v106, 1e-16
    %v282 = vrcp.pop %v281
    %v283 = vmul.f32 %v281, %v282
    %v284 = vsub.f32 1.0, %v283
    %v285 = vmul.f32 %v282, %v284
    %v286 = vadd.f32 %v282, %v285
    %vm287 = vweird.f32 %v281
    %vm288 = vweird.f32 %v282
    %vm289 = vmor %vm287, %vm288
    %v290 = vsel %vm289, %v282, %v286
    %v291 = vand.u32 2147483647, %v281
    %vm292 = vcmp.eq.f32.partialorder %v291, 8.507059e+37
    %v293 = vand.u32 %v281, 2147483648
    %v294 = vor.u32 1.1754944e-38, %v293
    %v295 = vsel %vm292, %v294, %v290
    %v296 = vmul.f32 %v112, %v295
    %v297 = vsub.f32 %v98, %v296
    %v298 = vmul.f32 %v280, %v257
    %v300 = vrot.slane %v298, 2
    %v302 = vsub.f32 %v297, %v300
    %v303 = vmax.f32 %v302, -1.0
    %v304 = vmin.f32 %v303, 1.0
    %v305 = vsub.f32 1.0, %v304
    %306 = vst [vmem:[#allocation7] sm:$0x1] %v305
    // Predicated region
    $region18: #{tpu_custom_call.1} parent=1 // pred_check
      _
    $region19: #{tpu_custom_call.1} parent=1 // pred_check_branch
      %308 = sbr.rel (0) target = $region21
    $region20: #{tpu_custom_call.1} parent=1 // pred_region
      %310 = vsyncadd [#allocation4], 0
      %s312 = sshll.u32 [#allocation7], 4
      %s313 = int_to_ptr.vmem [resolvable:$true] %s312
      %s314 = sshll.u32 %s2, 4
      %s315 = int_to_ptr.hbm [resolvable:$true] %s314
      %317 = dma.vmem_to_hbm [thread:$0]  %s313, 16, %s315, [#allocation4]
    $region21: #{tpu_custom_call.1} parent=1 // pred_fallthru
      _
    // Predicated region
    $region22: #{tpu_custom_call.1} parent=1 // pred_check
      _
    $region23: #{tpu_custom_call.1} parent=1 // pred_check_branch
      %319 = sbr.rel (0) target = $region25
    $region24: #{tpu_custom_call.1} parent=1 // pred_region
      %321 = dma.done [#allocation4], 16
    $region25: #{tpu_custom_call.1} parent=1 // pred_fallthru
      _
    %322 = vsyncpa [#allocation3], 1
    %323 = vsyncpa [#allocation6], 1
    %324 = vsyncpa [#allocation4], 1

</llo_original>
